<compile_context>
chip_gen: v6e
topology: v6e:2x2x1
jax: 0.10.0
libtpu: 0.0.40
codegen_flags: <defaults>
</compile_context>

<pallas_src>
import functools

import jax
import jax.numpy as jnp
from jax.experimental import pallas as pl
from jax.experimental.pallas import tpu as pltpu

INPUT_SIZE = 32      # stands in for config_yaml['net']['input_size']
HIDDEN = 64
NUM_CLASSES = 10
OUT_PAD = 128        # lane-dense output width (multiple of 128 >= NUM_CLASSES)
NEG_BIG = -1e30      # finite "-inf" for padded logit lanes (avoids inf-inf NaN)


def _round_up(n, m):
    return ((n + m - 1) // m) * m


def lenet_kernel(x_ref, w1_ref, b1_ref, w2_ref, b2_ref,
                 w3_ref, b3_ref, w4_ref, b4_ref, o_ref):
    """Fused 4-layer MLP + log_softmax on one batch tile (everything in VMEM).

    Dots take bf16 operands (native MXU) and accumulate in f32; relu / exp /
    log / max / sum stay in f32 (EUP + XLU slots, effectively free here).
    """
    x = x_ref[...].astype(jnp.bfloat16)

    # fc1 + relu
    h = jnp.dot(x, w1_ref[...], preferred_element_type=jnp.float32) + b1_ref[...]
    h = jnp.maximum(h, 0.0)
    # fc2 + relu
    h = jnp.dot(h.astype(jnp.bfloat16), w2_ref[...],
                preferred_element_type=jnp.float32) + b2_ref[...]
    h = jnp.maximum(h, 0.0)
    # fc3 + relu
    h = jnp.dot(h.astype(jnp.bfloat16), w3_ref[...],
                preferred_element_type=jnp.float32) + b3_ref[...]
    h = jnp.maximum(h, 0.0)
    # fc4: padded to OUT_PAD lanes.  Pad columns of w4 are zero and pad lanes
    # of b4 are NEG_BIG, so padded logits are ~-1e30 and contribute nothing
    # to the max or the exp-sum below.
    logits = jnp.dot(h.astype(jnp.bfloat16), w4_ref[...],
                     preferred_element_type=jnp.float32) + b4_ref[...]

    # log_softmax over the class axis (numerically stable, all f32).
    m = jnp.max(logits, axis=-1, keepdims=True)
    shifted = logits - m
    lse = jnp.log(jnp.sum(jnp.exp(shifted), axis=-1, keepdims=True))
    o_ref[...] = shifted - lse


@functools.partial(jax.jit, static_argnames=("batch_tile",))
def lenet_forward(x, params, batch_tile=256):
    """x: (B, INPUT_SIZE) float32.  Returns (B, NUM_CLASSES) f32 log-probs."""
    B, D = x.shape

    # --- pick the batch tile (all static shape math) -----------------------
    # Large tiles amortize per-grid-step overhead; for small batches shrink
    # the tile but still try to keep >= 2 grid steps so the "parallel" batch
    # axis can shard across both TensorCores on v7x.
    Bp = _round_up(B, 8)
    bt = _round_up(min(batch_tile, Bp), 8)
    if Bp // bt < 2 and Bp >= 16:
        bt = _round_up(max(8, Bp // 2), 8)
    Bp = _round_up(Bp, bt)

    # Pad the batch with zero rows (sliced away below).
    xp = jnp.zeros((Bp, D), jnp.float32).at[:B].set(x.astype(jnp.float32))

    # Matmul operands in bf16 (native MXU); biases stay f32.
    w1 = params["w1"].astype(jnp.bfloat16)
    w2 = params["w2"].astype(jnp.bfloat16)
    w3 = params["w3"].astype(jnp.bfloat16)
    # Lane-dense last layer: pad to (HIDDEN, OUT_PAD) / (1, OUT_PAD).
    w4 = jnp.zeros((HIDDEN, OUT_PAD), jnp.bfloat16).at[:, :NUM_CLASSES].set(
        params["w4"].astype(jnp.bfloat16))
    b4 = jnp.full((1, OUT_PAD), NEG_BIG, jnp.float32).at[:, :NUM_CLASSES].set(
        params["b4"].astype(jnp.float32))

    grid = (Bp // bt,)

    # Parameters are tiny (~20 KiB total) and use constant block indices, so
    # they are DMA'd once and stay VMEM-resident across all batch steps.
    def rep(shape):
        return pl.BlockSpec(shape, lambda i: (0, 0))

    # VMEM budget (double-buffered x tile + resident params + out tile) is a
    # few hundred KiB even at bt=1024 -> far below the 32 MiB default scoped
    # limit on every generation (incl. v7x's 64 MiB physical VMEM).
    out = pl.pallas_call(
        lenet_kernel,
        out_shape=jax.ShapeDtypeStruct((Bp, OUT_PAD), jnp.float32),
        grid_spec=pl.GridSpec(
            grid=grid,
            in_specs=[
                pl.BlockSpec((bt, D), lambda i: (i, 0)),   # x tile
                rep(w1.shape), rep(params["b1"].shape),
                rep(w2.shape), rep(params["b2"].shape),
                rep(w3.shape), rep(params["b3"].shape),
                rep(w4.shape), rep(b4.shape),
            ],
            out_specs=pl.BlockSpec((bt, OUT_PAD), lambda i: (i, 0)),
        ),
        compiler_params=pltpu.CompilerParams(
            dimension_semantics=("parallel",),
        ),
    )(xp, w1, params["b1"], w2, params["b2"], w3, params["b3"], w4, b4)

    return out[:B, :NUM_CLASSES]


def init_params(key):
    """Deterministic init mirroring PyTorch Linear's U(-1/sqrt(fan_in), ...).

    Weights are stored already transposed to (in_features, out_features)."""
    dims = [(INPUT_SIZE, HIDDEN), (HIDDEN, HIDDEN),
            (HIDDEN, HIDDEN), (HIDDEN, NUM_CLASSES)]
    params = {}
    for idx, (fan_in, fan_out) in enumerate(dims, start=1):
        key, kw, kb = jax.random.split(key, 3)
        bound = 1.0 / jnp.sqrt(fan_in)
        params[f"w{idx}"] = jax.random.uniform(
            kw, (fan_in, fan_out), jnp.float32, minval=-bound, maxval=bound)
        params[f"b{idx}"] = jax.random.uniform(
            kb, (1, fan_out), jnp.float32, minval=-bound, maxval=bound)
    return params


def lenet_reference_f32(x, params):
    """Pure f32 JAX reference (module semantics)."""
    h = jax.nn.relu(x @ params["w1"] + params["b1"])
    h = jax.nn.relu(h @ params["w2"] + params["b2"])
    h = jax.nn.relu(h @ params["w3"] + params["b3"])
    logits = h @ params["w4"] + params["b4"]
    return jax.nn.log_softmax(logits, axis=1)


def lenet_reference_bf16(x, params):
    """Reference that mirrors the kernel's bf16-operand / f32-accumulate math."""
    def dot(a, w):
        return jnp.dot(a.astype(jnp.bfloat16), w.astype(jnp.bfloat16),
                       preferred_element_type=jnp.float32)
    h = jax.nn.relu(dot(x, params["w1"]) + params["b1"])
    h = jax.nn.relu(dot(h, params["w2"]) + params["b2"])
    h = jax.nn.relu(dot(h, params["w3"]) + params["b3"])
    logits = dot(h, params["w4"]) + params["b4"]
    return jax.nn.log_softmax(logits, axis=1)


if __name__ == "__main__":
    key = jax.random.PRNGKey(0)
    kx, kp = jax.random.split(key)

    B = 24   # ragged on purpose: exercises batch padding + a 2-step grid
    x = jax.random.normal(kx, (B, INPUT_SIZE), jnp.float32)
    params = init_params(kp)

    out = lenet_forward(x, params)
    out = jax.block_until_ready(out)

    assert out.shape == (B, NUM_CLASSES)
    ref_bf16 = lenet_reference_bf16(x, params)
    ref_f32 = lenet_reference_f32(x, params)
    assert jnp.allclose(out, ref_bf16, atol=1e-3, rtol=1e-3), \
        "mismatch vs bf16-matmul reference"
    assert jnp.allclose(out, ref_f32, atol=1e-1), \
        "mismatch vs f32 reference beyond bf16 tolerance"
    assert bool(jnp.all(jnp.isfinite(out)))

    print("KERNEL_OK")
</pallas_src>

<mosaic_0001>
module attributes {stable_mosaic.version = 11 : i64} {
  func.func @lenet_kernel(%arg0: i32, %arg1: memref<16x32xf32, #tpu.memory_space<vmem>>, %arg2: memref<32x64xbf16, #tpu.memory_space<vmem>>, %arg3: memref<1x64xf32, #tpu.memory_space<vmem>>, %arg4: memref<64x64xbf16, #tpu.memory_space<vmem>>, %arg5: memref<1x64xf32, #tpu.memory_space<vmem>>, %arg6: memref<64x64xbf16, #tpu.memory_space<vmem>>, %arg7: memref<1x64xf32, #tpu.memory_space<vmem>>, %arg8: memref<64x128xbf16, #tpu.memory_space<vmem>>, %arg9: memref<1x128xf32, #tpu.memory_space<vmem>>, %arg10: memref<16x128xf32, #tpu.memory_space<vmem>>) attributes {dimension_semantics = [#tpu.dimension_semantics<parallel>], iteration_bounds = array<i64: 2>, scalar_prefetch = 0 : i64, scratch_operands = 0 : i64, tpu.core_type = #tpu.core_type<tc>, window_params = [{transform_indices = @transform_0, window_bounds = array<i64: 16, 32>}, {pipeline_mode = #tpu.pipeline_mode<synchronous>, transform_indices = @transform_1, window_bounds = array<i64: 32, 64>}, {pipeline_mode = #tpu.pipeline_mode<synchronous>, transform_indices = @transform_2, window_bounds = array<i64: 1, 64>}, {pipeline_mode = #tpu.pipeline_mode<synchronous>, transform_indices = @transform_3, window_bounds = array<i64: 64, 64>}, {pipeline_mode = #tpu.pipeline_mode<synchronous>, transform_indices = @transform_4, window_bounds = array<i64: 1, 64>}, {pipeline_mode = #tpu.pipeline_mode<synchronous>, transform_indices = @transform_5, window_bounds = array<i64: 64, 64>}, {pipeline_mode = #tpu.pipeline_mode<synchronous>, transform_indices = @transform_6, window_bounds = array<i64: 1, 64>}, {pipeline_mode = #tpu.pipeline_mode<synchronous>, transform_indices = @transform_7, window_bounds = array<i64: 64, 128>}, {pipeline_mode = #tpu.pipeline_mode<synchronous>, transform_indices = @transform_8, window_bounds = array<i64: 1, 128>}, {transform_indices = @transform_9, window_bounds = array<i64: 16, 128>}]} {
    %c0 = arith.constant 0 : index
    %c0_0 = arith.constant 0 : index
    %0 = vector.load %arg1[%c0, %c0_0] : memref<16x32xf32, #tpu.memory_space<vmem>>, vector<16x32xf32>
    %1 = arith.truncf %0 : vector<16x32xf32> to vector<16x32xbf16>
    %c0_1 = arith.constant 0 : index
    %c0_2 = arith.constant 0 : index
    %2 = vector.load %arg2[%c0_1, %c0_2] : memref<32x64xbf16, #tpu.memory_space<vmem>>, vector<32x64xbf16>
    %cst = arith.constant dense<0.000000e+00> : vector<16x64xf32>
    %3 = tpu.matmul %1, %2, %cst {dimension_numbers = #tpu.dot_dimension_numbers<[1], [0], [0], [1], [0, 0, 1, 1], [], []>} : vector<16x32xbf16>, vector<32x64xbf16>, vector<16x64xf32> -> vector<16x64xf32>
    %c0_3 = arith.constant 0 : index
    %c0_4 = arith.constant 0 : index
    %4 = vector.load %arg3[%c0_3, %c0_4] : memref<1x64xf32, #tpu.memory_space<vmem>>, vector<1x64xf32>
    %5 = vector.broadcast %4 : vector<1x64xf32> to vector<16x64xf32>
    %6 = arith.addf %3, %5 : vector<16x64xf32>
    %cst_5 = arith.constant 0.000000e+00 : f32
    %7 = vector.broadcast %cst_5 : f32 to vector<16x64xf32>
    %8 = arith.maximumf %6, %7 : vector<16x64xf32>
    %9 = arith.truncf %8 : vector<16x64xf32> to vector<16x64xbf16>
    %c0_6 = arith.constant 0 : index
    %c0_7 = arith.constant 0 : index
    %10 = vector.load %arg4[%c0_6, %c0_7] : memref<64x64xbf16, #tpu.memory_space<vmem>>, vector<64x64xbf16>
    %cst_8 = arith.constant dense<0.000000e+00> : vector<16x64xf32>
    %11 = tpu.matmul %9, %10, %cst_8 {dimension_numbers = #tpu.dot_dimension_numbers<[1], [0], [0], [1], [0, 0, 1, 1], [], []>} : vector<16x64xbf16>, vector<64x64xbf16>, vector<16x64xf32> -> vector<16x64xf32>
    %c0_9 = arith.constant 0 : index
    %c0_10 = arith.constant 0 : index
    %12 = vector.load %arg5[%c0_9, %c0_10] : memref<1x64xf32, #tpu.memory_space<vmem>>, vector<1x64xf32>
    %13 = vector.broadcast %12 : vector<1x64xf32> to vector<16x64xf32>
    %14 = arith.addf %11, %13 : vector<16x64xf32>
    %cst_11 = arith.constant 0.000000e+00 : f32
    %15 = vector.broadcast %cst_11 : f32 to vector<16x64xf32>
    %16 = arith.maximumf %14, %15 : vector<16x64xf32>
    %17 = arith.truncf %16 : vector<16x64xf32> to vector<16x64xbf16>
    %c0_12 = arith.constant 0 : index
    %c0_13 = arith.constant 0 : index
    %18 = vector.load %arg6[%c0_12, %c0_13] : memref<64x64xbf16, #tpu.memory_space<vmem>>, vector<64x64xbf16>
    %cst_14 = arith.constant dense<0.000000e+00> : vector<16x64xf32>
    %19 = tpu.matmul %17, %18, %cst_14 {dimension_numbers = #tpu.dot_dimension_numbers<[1], [0], [0], [1], [0, 0, 1, 1], [], []>} : vector<16x64xbf16>, vector<64x64xbf16>, vector<16x64xf32> -> vector<16x64xf32>
    %c0_15 = arith.constant 0 : index
    %c0_16 = arith.constant 0 : index
    %20 = vector.load %arg7[%c0_15, %c0_16] : memref<1x64xf32, #tpu.memory_space<vmem>>, vector<1x64xf32>
    %21 = vector.broadcast %20 : vector<1x64xf32> to vector<16x64xf32>
    %22 = arith.addf %19, %21 : vector<16x64xf32>
    %cst_17 = arith.constant 0.000000e+00 : f32
    %23 = vector.broadcast %cst_17 : f32 to vector<16x64xf32>
    %24 = arith.maximumf %22, %23 : vector<16x64xf32>
    %25 = arith.truncf %24 : vector<16x64xf32> to vector<16x64xbf16>
    %c0_18 = arith.constant 0 : index
    %c0_19 = arith.constant 0 : index
    %26 = vector.load %arg8[%c0_18, %c0_19] : memref<64x128xbf16, #tpu.memory_space<vmem>>, vector<64x128xbf16>
    %cst_20 = arith.constant dense<0.000000e+00> : vector<16x128xf32>
    %27 = tpu.matmul %25, %26, %cst_20 {dimension_numbers = #tpu.dot_dimension_numbers<[1], [0], [0], [1], [0, 0, 1, 1], [], []>} : vector<16x64xbf16>, vector<64x128xbf16>, vector<16x128xf32> -> vector<16x128xf32>
    %c0_21 = arith.constant 0 : index
    %c0_22 = arith.constant 0 : index
    %28 = vector.load %arg9[%c0_21, %c0_22] : memref<1x128xf32, #tpu.memory_space<vmem>>, vector<1x128xf32>
    %29 = vector.broadcast %28 : vector<1x128xf32> to vector<16x128xf32>
    %30 = arith.addf %27, %29 : vector<16x128xf32>
    %cst_23 = arith.constant dense<0xFF800000> : vector<16xf32>
    %31 = vector.multi_reduction <maximumf>, %30, %cst_23 [1] : vector<16x128xf32> to vector<16xf32>
    %32 = vector.shape_cast %31 : vector<16xf32> to vector<16x1xf32>
    %33 = vector.broadcast %32 : vector<16x1xf32> to vector<16x128xf32>
    %34 = arith.subf %30, %33 : vector<16x128xf32>
    %35 = math.exp %34 : vector<16x128xf32>
    %cst_24 = arith.constant dense<0.000000e+00> : vector<16xf32>
    %36 = vector.multi_reduction <add>, %35, %cst_24 [1] : vector<16x128xf32> to vector<16xf32>
    %37 = vector.shape_cast %36 : vector<16xf32> to vector<16x1xf32>
    %38 = math.log %37 : vector<16x1xf32>
    %39 = vector.broadcast %38 : vector<16x1xf32> to vector<16x128xf32>
    %40 = arith.subf %34, %39 : vector<16x128xf32>
    %c0_25 = arith.constant 0 : index
    %c0_26 = arith.constant 0 : index
    %41 = vector.load %arg10[%c0_25, %c0_26] : memref<16x128xf32, #tpu.memory_space<vmem>>, vector<16x128xf32>
    tpu.vector_store %arg10[%c0_25, %c0_26], %40 {strides = array<i32>} : memref<16x128xf32, #tpu.memory_space<vmem>>, vector<16x128xf32>,
    return
  }
  func.func @transform_0(%arg0: i32) -> (i32, i32) {
    %c0_i32 = arith.constant 0 : i32
    %c0_i32_0 = arith.constant 0 : i32
    return %arg0, %c0_i32 : i32, i32
  }
  func.func @transform_1(%arg0: i32) -> (i32, i32) {
    %c0_i32 = arith.constant 0 : i32
    %c0_i32_0 = arith.constant 0 : i32
    %c0_i32_1 = arith.constant 0 : i32
    return %c0_i32, %c0_i32_0 : i32, i32
  }
  func.func @transform_2(%arg0: i32) -> (i32, i32) {
    %c0_i32 = arith.constant 0 : i32
    %c0_i32_0 = arith.constant 0 : i32
    %c0_i32_1 = arith.constant 0 : i32
    return %c0_i32, %c0_i32_0 : i32, i32
  }
  func.func @transform_3(%arg0: i32) -> (i32, i32) {
    %c0_i32 = arith.constant 0 : i32
    %c0_i32_0 = arith.constant 0 : i32
    %c0_i32_1 = arith.constant 0 : i32
    return %c0_i32, %c0_i32_0 : i32, i32
  }
  func.func @transform_4(%arg0: i32) -> (i32, i32) {
    %c0_i32 = arith.constant 0 : i32
    %c0_i32_0 = arith.constant 0 : i32
    %c0_i32_1 = arith.constant 0 : i32
    return %c0_i32, %c0_i32_0 : i32, i32
  }
  func.func @transform_5(%arg0: i32) -> (i32, i32) {
    %c0_i32 = arith.constant 0 : i32
    %c0_i32_0 = arith.constant 0 : i32
    %c0_i32_1 = arith.constant 0 : i32
    return %c0_i32, %c0_i32_0 : i32, i32
  }
  func.func @transform_6(%arg0: i32) -> (i32, i32) {
    %c0_i32 = arith.constant 0 : i32
    %c0_i32_0 = arith.constant 0 : i32
    %c0_i32_1 = arith.constant 0 : i32
    return %c0_i32, %c0_i32_0 : i32, i32
  }
  func.func @transform_7(%arg0: i32) -> (i32, i32) {
    %c0_i32 = arith.constant 0 : i32
    %c0_i32_0 = arith.constant 0 : i32
    %c0_i32_1 = arith.constant 0 : i32
    return %c0_i32, %c0_i32_0 : i32, i32
  }
  func.func @transform_8(%arg0: i32) -> (i32, i32) {
    %c0_i32 = arith.constant 0 : i32
    %c0_i32_0 = arith.constant 0 : i32
    %c0_i32_1 = arith.constant 0 : i32
    return %c0_i32, %c0_i32_0 : i32, i32
  }
  func.func @transform_9(%arg0: i32) -> (i32, i32) {
    %c0_i32 = arith.constant 0 : i32
    %c0_i32_0 = arith.constant 0 : i32
    return %arg0, %c0_i32 : i32, i32
  }
}

</mosaic_0001>

<llo_original>
// kernel: lenet_forward.1
$region0: #{lenet_forward.1}
  #allocation0 [shape = 'u32[]', space=smem, size = 0x4, offset = 0x4, fixed_abs, tag = 'smem constant byte address 0x4 - core index']
  #allocation1 [shape = 'u32[144,128]{1,0:T(1,128)}', space=vmem, size = 0x12000, scoped, tag = 'internal scratch']
  %s0 = inlined_call_operand.vmem [shape: f32[32,32], index: 0, kind: input, shape index: {}]
  %s1 = inlined_call_operand.vmem [shape: bf16[32,64], index: 1, kind: input, shape index: {}]
  %s2 = inlined_call_operand.vmem [shape: f32[1,64], index: 2, kind: input, shape index: {}]
  %s3 = inlined_call_operand.vmem [shape: bf16[64,64], index: 3, kind: input, shape index: {}]
  %s4 = inlined_call_operand.vmem [shape: f32[1,64], index: 4, kind: input, shape index: {}]
  %s5 = inlined_call_operand.vmem [shape: bf16[64,64], index: 5, kind: input, shape index: {}]
  %s6 = inlined_call_operand.vmem [shape: f32[1,64], index: 6, kind: input, shape index: {}]
  %s7 = inlined_call_operand.vmem [shape: bf16[64,128], index: 7, kind: input, shape index: {}]
  %s8 = inlined_call_operand.vmem [shape: f32[1,128], index: 8, kind: input, shape index: {}]
  %s9 = inlined_call_operand.vmem [shape: f32[32,128], index: 9, kind: output, shape index: {}]
  %s10 = sld [smem:[#allocation0]]
  $region69: #{lenet_forward.1} parent=0
    _
  %s12 = ssub.s32 1, %s10
  %s13 = scalar_select 0, %s12, %s10
  loop: start=0, step=1, limit=4
  $region2: #{lenet_forward.1} parent=0 // loop_pre_header
    _
  $region3: #{lenet_forward.1} parent=0 // loop_header
    %s15 = sphi 0, %s19
    %p16 = scmp.ge.s32.totalorder %s15, 4
    %s25 = sphi 0, %s27
    %s28 = sphi 0, %s25
    %s29 = sphi 0, %s28
    %s45 = sphi 0, %s29
    %s49 = sphi 0, %s49
    %s51 = sphi 0, %s49
    %s52 = sphi 0, %s51
    %s66 = sphi 0, %s52
    %s70 = sphi 0, %s70
    %s72 = sphi 0, %s70
    %s73 = sphi 0, %s72
    %s87 = sphi 0, %s73
    %s91 = sphi 0, %s91
    %s93 = sphi 0, %s91
    %s94 = sphi 0, %s93
    %s108 = sphi 0, %s94
    %s112 = sphi 0, %s112
    %s114 = sphi 0, %s112
    %s115 = sphi 0, %s114
    %s129 = sphi 0, %s115
    %s133 = sphi 0, %s133
    %s135 = sphi 0, %s133
    %s136 = sphi 0, %s135
    %s150 = sphi 0, %s136
    %s154 = sphi 0, %s154
    %s156 = sphi 0, %s154
    %s157 = sphi 0, %s156
    %s171 = sphi 0, %s157
    %s175 = sphi 0, %s175
    %s177 = sphi 0, %s175
    %s178 = sphi 0, %s177
    %s192 = sphi 0, %s178
    %s196 = sphi 0, %s196
    %s198 = sphi 0, %s196
    %s199 = sphi 0, %s198
    %s213 = sphi 0, %s199
    %s219 = sphi 0, %s221
    %s222 = sphi 0, %s219
    %s223 = sphi 0, %s222
    %s239 = sphi 0, %s223
  $region4: #{lenet_forward.1} parent=0 // loop_header_branch
    %18 = sbr.rel (%p16) target = $region8
  $region5: #{lenet_forward.1} parent=0 // loop_body
    %s20 = ssub.s32 %s15, 1
    %s21 = ssub.s32 %s15, 2
    %s22 = sadd.s32 %s15, 1
    %s23 = ssub.s32 %s15, %s22
    %p24 = scmp.eq.s32.totalorder %s23, 0
    %s26 = sadd.s32 %s25, 1
    %s27 = scalar_select %p24, %s25, %s26
    %p30 = pneg %p24
    %p31 = scmp.eq.s32.totalorder %s15, 1
    %p32 = por %p30, %p31
    %p33 = scmp.ne.s32.totalorder %s25, %s28
    %p34 = scmp.eq.s32.totalorder %s15, 0
    %p35 = por %p33, %p34
    %p36 = scmp.ne.s32.totalorder %s25, %s28
    %p37 = scmp.eq.s32.totalorder %s20, 1
    %p38 = por %p36, %p37
    %p39 = scmp.ne.s32.totalorder %s28, %s29
    %p40 = scmp.eq.s32.totalorder %s20, 0
    %p41 = por %p39, %p40
    %p42 = scmp.ne.s32.totalorder %s28, %s29
    %p43 = scmp.eq.s32.totalorder %s21, 1
    %p44 = por %p42, %p43
    %p46 = scmp.ne.s32.totalorder %s29, %s45
    %p47 = scmp.eq.s32.totalorder %s21, 0
    %p48 = por %p46, %p47
    %s50 = sadd.s32 %s49, 1
    %p53 = scmp.eq.s32.totalorder %s15, 1
    %p54 = scmp.ne.s32.totalorder %s49, %s51
    %p55 = scmp.eq.s32.totalorder %s15, 0
    %p56 = por %p54, %p55
    %p57 = scmp.ne.s32.totalorder %s49, %s51
    %p58 = scmp.eq.s32.totalorder %s20, 1
    %p59 = por %p57, %p58
    %p60 = scmp.ne.s32.totalorder %s51, %s52
    %p61 = scmp.eq.s32.totalorder %s20, 0
    %p62 = por %p60, %p61
    %p63 = scmp.ne.s32.totalorder %s51, %s52
    %p64 = scmp.eq.s32.totalorder %s21, 1
    %p65 = por %p63, %p64
    %p67 = scmp.ne.s32.totalorder %s52, %s66
    %p68 = scmp.eq.s32.totalorder %s21, 0
    %p69 = por %p67, %p68
    %s71 = sadd.s32 %s70, 1
    %p74 = scmp.eq.s32.totalorder %s15, 1
    %p75 = scmp.ne.s32.totalorder %s70, %s72
    %p76 = scmp.eq.s32.totalorder %s15, 0
    %p77 = por %p75, %p76
    %p78 = scmp.ne.s32.totalorder %s70, %s72
    %p79 = scmp.eq.s32.totalorder %s20, 1
    %p80 = por %p78, %p79
    %p81 = scmp.ne.s32.totalorder %s72, %s73
    %p82 = scmp.eq.s32.totalorder %s20, 0
    %p83 = por %p81, %p82
    %p84 = scmp.ne.s32.totalorder %s72, %s73
    %p85 = scmp.eq.s32.totalorder %s21, 1
    %p86 = por %p84, %p85
    %p88 = scmp.ne.s32.totalorder %s73, %s87
    %p89 = scmp.eq.s32.totalorder %s21, 0
    %p90 = por %p88, %p89
    %s92 = sadd.s32 %s91, 1
    %p95 = scmp.eq.s32.totalorder %s15, 1
    %p96 = scmp.ne.s32.totalorder %s91, %s93
    %p97 = scmp.eq.s32.totalorder %s15, 0
    %p98 = por %p96, %p97
    %p99 = scmp.ne.s32.totalorder %s91, %s93
    %p100 = scmp.eq.s32.totalorder %s20, 1
    %p101 = por %p99, %p100
    %p102 = scmp.ne.s32.totalorder %s93, %s94
    %p103 = scmp.eq.s32.totalorder %s20, 0
    %p104 = por %p102, %p103
    %p105 = scmp.ne.s32.totalorder %s93, %s94
    %p106 = scmp.eq.s32.totalorder %s21, 1
    %p107 = por %p105, %p106
    %p109 = scmp.ne.s32.totalorder %s94, %s108
    %p110 = scmp.eq.s32.totalorder %s21, 0
    %p111 = por %p109, %p110
    %s113 = sadd.s32 %s112, 1
    %p116 = scmp.eq.s32.totalorder %s15, 1
    %p117 = scmp.ne.s32.totalorder %s112, %s114
    %p118 = scmp.eq.s32.totalorder %s15, 0
    %p119 = por %p117, %p118
    %p120 = scmp.ne.s32.totalorder %s112, %s114
    %p121 = scmp.eq.s32.totalorder %s20, 1
    %p122 = por %p120, %p121
    %p123 = scmp.ne.s32.totalorder %s114, %s115
    %p124 = scmp.eq.s32.totalorder %s20, 0
    %p125 = por %p123, %p124
    %p126 = scmp.ne.s32.totalorder %s114, %s115
    %p127 = scmp.eq.s32.totalorder %s21, 1
    %p128 = por %p126, %p127
    %p130 = scmp.ne.s32.totalorder %s115, %s129
    %p131 = scmp.eq.s32.totalorder %s21, 0
    %p132 = por %p130, %p131
    %s134 = sadd.s32 %s133, 1
    %p137 = scmp.eq.s32.totalorder %s15, 1
    %p138 = scmp.ne.s32.totalorder %s133, %s135
    %p139 = scmp.eq.s32.totalorder %s15, 0
    %p140 = por %p138, %p139
    %p141 = scmp.ne.s32.totalorder %s133, %s135
    %p142 = scmp.eq.s32.totalorder %s20, 1
    %p143 = por %p141, %p142
    %p144 = scmp.ne.s32.totalorder %s135, %s136
    %p145 = scmp.eq.s32.totalorder %s20, 0
    %p146 = por %p144, %p145
    %p147 = scmp.ne.s32.totalorder %s135, %s136
    %p148 = scmp.eq.s32.totalorder %s21, 1
    %p149 = por %p147, %p148
    %p151 = scmp.ne.s32.totalorder %s136, %s150
    %p152 = scmp.eq.s32.totalorder %s21, 0
    %p153 = por %p151, %p152
    %s155 = sadd.s32 %s154, 1
    %p158 = scmp.eq.s32.totalorder %s15, 1
    %p159 = scmp.ne.s32.totalorder %s154, %s156
    %p160 = scmp.eq.s32.totalorder %s15, 0
    %p161 = por %p159, %p160
    %p162 = scmp.ne.s32.totalorder %s154, %s156
    %p163 = scmp.eq.s32.totalorder %s20, 1
    %p164 = por %p162, %p163
    %p165 = scmp.ne.s32.totalorder %s156, %s157
    %p166 = scmp.eq.s32.totalorder %s20, 0
    %p167 = por %p165, %p166
    %p168 = scmp.ne.s32.totalorder %s156, %s157
    %p169 = scmp.eq.s32.totalorder %s21, 1
    %p170 = por %p168, %p169
    %p172 = scmp.ne.s32.totalorder %s157, %s171
    %p173 = scmp.eq.s32.totalorder %s21, 0
    %p174 = por %p172, %p173
    %s176 = sadd.s32 %s175, 1
    %p179 = scmp.eq.s32.totalorder %s15, 1
    %p180 = scmp.ne.s32.totalorder %s175, %s177
    %p181 = scmp.eq.s32.totalorder %s15, 0
    %p182 = por %p180, %p181
    %p183 = scmp.ne.s32.totalorder %s175, %s177
    %p184 = scmp.eq.s32.totalorder %s20, 1
    %p185 = por %p183, %p184
    %p186 = scmp.ne.s32.totalorder %s177, %s178
    %p187 = scmp.eq.s32.totalorder %s20, 0
    %p188 = por %p186, %p187
    %p189 = scmp.ne.s32.totalorder %s177, %s178
    %p190 = scmp.eq.s32.totalorder %s21, 1
    %p191 = por %p189, %p190
    %p193 = scmp.ne.s32.totalorder %s178, %s192
    %p194 = scmp.eq.s32.totalorder %s21, 0
    %p195 = por %p193, %p194
    %s197 = sadd.s32 %s196, 1
    %p200 = scmp.eq.s32.totalorder %s15, 1
    %p201 = scmp.ne.s32.totalorder %s196, %s198
    %p202 = scmp.eq.s32.totalorder %s15, 0
    %p203 = por %p201, %p202
    %p204 = scmp.ne.s32.totalorder %s196, %s198
    %p205 = scmp.eq.s32.totalorder %s20, 1
    %p206 = por %p204, %p205
    %p207 = scmp.ne.s32.totalorder %s198, %s199
    %p208 = scmp.eq.s32.totalorder %s20, 0
    %p209 = por %p207, %p208
    %p210 = scmp.ne.s32.totalorder %s198, %s199
    %p211 = scmp.eq.s32.totalorder %s21, 1
    %p212 = por %p210, %p211
    %p214 = scmp.ne.s32.totalorder %s199, %s213
    %p215 = scmp.eq.s32.totalorder %s21, 0
    %p216 = por %p214, %p215
    %s217 = ssub.s32 %s15, %s22
    %p218 = scmp.eq.s32.totalorder %s217, 0
    %s220 = sadd.s32 %s219, 1
    %s221 = scalar_select %p218, %s219, %s220
    %p224 = pneg %p218
    %p225 = scmp.eq.s32.totalorder %s15, 1
    %p226 = por %p224, %p225
    %p227 = scmp.ne.s32.totalorder %s219, %s222
    %p228 = scmp.eq.s32.totalorder %s15, 0
    %p229 = por %p227, %p228
    %p230 = scmp.ne.s32.totalorder %s219, %s222
    %p231 = scmp.eq.s32.totalorder %s20, 1
    %p232 = por %p230, %p231
    %p233 = scmp.ne.s32.totalorder %s222, %s223
    %p234 = scmp.eq.s32.totalorder %s20, 0
    %p235 = por %p233, %p234
    %p236 = scmp.ne.s32.totalorder %s222, %s223
    %p237 = scmp.eq.s32.totalorder %s21, 1
    %p238 = por %p236, %p237
    %p240 = scmp.ne.s32.totalorder %s223, %s239
    %p241 = scmp.eq.s32.totalorder %s21, 0
    %p242 = por %p240, %p241
    %p243 = scmp.le.s32.totalorder 1, %s15
    %p244 = scmp.lt.s32.totalorder %s15, 3
    %p245 = pnand %p243, %p244
    %p246 = pneg %p245
    // Predicated region
    $region9: #{lenet_forward.1} parent=5 // pred_check
      _
    $region10: #{lenet_forward.1} parent=5 // pred_check_branch
      %248 = sbr.rel (%p245) target = $region12
    $region11: #{lenet_forward.1} parent=5 // pred_region
      %s249 = ssub.s32 %s15, 1
      // Predicated region
      $region13: #{lenet_forward.1} parent=11 // pred_check
        %p250 = pneg %p62
      $region14: #{lenet_forward.1} parent=11 // pred_check_branch
        %252 = sbr.rel (%p250) target = $region16
      $region15: #{lenet_forward.1} parent=11 // pred_region
        _
      $region16: #{lenet_forward.1} parent=11 // pred_fallthru
        _
      // Predicated region
      $region17: #{lenet_forward.1} parent=11 // pred_check
        %p253 = pneg %p83
      $region18: #{lenet_forward.1} parent=11 // pred_check_branch
        %255 = sbr.rel (%p253) target = $region20
      $region19: #{lenet_forward.1} parent=11 // pred_region
        _
      $region20: #{lenet_forward.1} parent=11 // pred_fallthru
        _
      // Predicated region
      $region21: #{lenet_forward.1} parent=11 // pred_check
        %p256 = pneg %p104
      $region22: #{lenet_forward.1} parent=11 // pred_check_branch
        %258 = sbr.rel (%p256) target = $region24
      $region23: #{lenet_forward.1} parent=11 // pred_region
        _
      $region24: #{lenet_forward.1} parent=11 // pred_fallthru
        _
      // Predicated region
      $region25: #{lenet_forward.1} parent=11 // pred_check
        %p259 = pneg %p125
      $region26: #{lenet_forward.1} parent=11 // pred_check_branch
        %261 = sbr.rel (%p259) target = $region28
      $region27: #{lenet_forward.1} parent=11 // pred_region
        _
      $region28: #{lenet_forward.1} parent=11 // pred_fallthru
        _
      // Predicated region
      $region29: #{lenet_forward.1} parent=11 // pred_check
        %p262 = pneg %p146
      $region30: #{lenet_forward.1} parent=11 // pred_check_branch
        %264 = sbr.rel (%p262) target = $region32
      $region31: #{lenet_forward.1} parent=11 // pred_region
        _
      $region32: #{lenet_forward.1} parent=11 // pred_fallthru
        _
      // Predicated region
      $region33: #{lenet_forward.1} parent=11 // pred_check
        %p265 = pneg %p167
      $region34: #{lenet_forward.1} parent=11 // pred_check_branch
        %267 = sbr.rel (%p265) target = $region36
      $region35: #{lenet_forward.1} parent=11 // pred_region
        _
      $region36: #{lenet_forward.1} parent=11 // pred_fallthru
        _
      // Predicated region
      $region37: #{lenet_forward.1} parent=11 // pred_check
        %p268 = pneg %p188
      $region38: #{lenet_forward.1} parent=11 // pred_check_branch
        %270 = sbr.rel (%p268) target = $region40
      $region39: #{lenet_forward.1} parent=11 // pred_region
        _
      $region40: #{lenet_forward.1} parent=11 // pred_fallthru
        _
      // Predicated region
      $region41: #{lenet_forward.1} parent=11 // pred_check
        %p271 = pneg %p209
      $region42: #{lenet_forward.1} parent=11 // pred_check_branch
        %273 = sbr.rel (%p271) target = $region44
      $region43: #{lenet_forward.1} parent=11 // pred_region
        _
      $region44: #{lenet_forward.1} parent=11 // pred_fallthru
        _
    $region12: #{lenet_forward.1} parent=5 // pred_fallthru
      _
    %p274 = scmp.lt.s32.totalorder %s15, 2
    // Predicated region
    $region45: #{lenet_forward.1} parent=5 // pred_check
      %p275 = pneg %p274
    $region46: #{lenet_forward.1} parent=5 // pred_check_branch
      %277 = sbr.rel (%p275) target = $region48
    $region47: #{lenet_forward.1} parent=5 // pred_region
      // Predicated region
      $region49: #{lenet_forward.1} parent=47 // pred_check
        %p278 = pneg %p35
      $region50: #{lenet_forward.1} parent=47 // pred_check_branch
        %280 = sbr.rel (%p278) target = $region52
      $region51: #{lenet_forward.1} parent=47 // pred_region
        %s281 = smul.u32 2, %s15
        %p282 = scmp.lt.s32.totalorder %s281, 3
        %s283 = scalar_select %p282, %s281, 3
        %s284 = smul.addr %s283, 8
        %s285 = scalar_lea.vmem %s0, %s284
        %s286 = smul.u32 2, %s15
      $region52: #{lenet_forward.1} parent=47 // pred_fallthru
        _
    $region48: #{lenet_forward.1} parent=5 // pred_fallthru
      _
    %p287 = scmp.le.s32.totalorder 1, %s15
    %p288 = scmp.lt.s32.totalorder %s15, 3
    %p289 = pnand %p287, %p288
    %p290 = pneg %p289
    // Predicated region
    $region53: #{lenet_forward.1} parent=5 // pred_check
      _
    $region54: #{lenet_forward.1} parent=5 // pred_check_branch
      %292 = sbr.rel (%p289) target = $region56
    $region55: #{lenet_forward.1} parent=5 // pred_region
      %s293 = ssub.s32 %s15, 1
      %s294 = smul.u32 2, %s20
      %p295 = scmp.lt.s32.totalorder %s294, 3
      %s296 = scalar_select %p295, %s294, 3
      %s297 = smul.addr %s296, 8
      %s298 = scalar_lea.vmem %s0, %s297
      %p299 = pneg %p41
      %p300 = pneg %p38
      %p301 = pneg %p62
      %p302 = pneg %p59
      %p303 = pneg %p83
      %p304 = pneg %p80
      %p305 = pneg %p104
      %p306 = pneg %p101
      %p307 = pneg %p125
      %p308 = pneg %p122
      %p309 = pneg %p146
      %p310 = pneg %p143
      %p311 = pneg %p167
      %p312 = pneg %p164
      %p313 = pneg %p188
      %p314 = pneg %p185
      %p315 = pneg %p209
      %p316 = pneg %p206
      %p317 = pneg %p235
      %p318 = pneg %p232
      %s319 = smul.u32 2, %s20
      %p320 = scmp.lt.s32.totalorder %s319, 3
      %s321 = scalar_select %p320, %s319, 3
      %s322 = smul.addr %s321, 8
      %s323 = scalar_lea.vmem %s9, %s322
      %s324 = smul.u32 2, %s20
      %p325 = scmp.lt.s32.totalorder %s324, 3
      %s326 = scalar_select %p325, %s324, 3
      %s327 = smul.addr %s326, 8
      %s328 = scalar_lea.vmem %s0, %s327
      %s329 = smul.u32 2, %s20
      %s330 = smul.u32 2, %s20
      %p331 = scmp.lt.s32.totalorder %s330, 3
      %s332 = scalar_select %p331, %s330, 3
      %s333 = smul.addr %s332, 8
      %s334 = scalar_lea.vmem %s9, %s333
      %s335 = smul.u32 2, %s20
      %v337 = vld [vmem:[%s328] sm:$0xff]
      %v338 = vld [vmem:[%s328 + $0x8] sm:$0xff]
      %v339 = vpack.c.bf16 %v338, %v337
      %v340 = vld [vmem:[%s1] sm:$0xf]
      %v341 = vld [vmem:[%s1 + $0x4] sm:$0xf]
      %v342 = vld [vmem:[%s1 + $0x8] sm:$0xf]
      %v343 = vld [vmem:[%s1 + $0xc] sm:$0xf]
      %v344 = vld [vmem:[%s2] sm:$0x1]
      %v346 = vlaneseq
      %v347 = vshrl.u32 %v346, 7
      %v348 = vsub.s32 0, %v347
      %v349 = vrot.slane %v344, %v348
      %v355 = vunpack.c.l.b16 %v340
      %v356 = vunpack.c.l.b16 %v341
      %v357 = vunpack.c.l.b16 %v342
      %v358 = vunpack.c.l.b16 %v343
      %v359 = vpack.c.b16 %v356, %v355
      %v360 = vpack.c.b16 %v358, %v357
      %vm363 = vcmask 261120
      %v365 = vsel %vm363, %v339, 0
      %367 = vmatprep.subr.bf16.mxu0 0
      %368 = vmatpush1.bf16.msra.mxu0 0
      %369 = vmatprep.subr.bf16.mxu0 0
      %370 = vmatpush1.bf16.msra.mxu0 0
      %371 = vmatprep.subr.bf16.mxu0 0
      %372 = vmatpush1.bf16.msra.mxu0 0
      %373 = vmatprep.subr.bf16.mxu0 0
      %374 = vmatpush1.bf16.msra.mxu0 0
      %375 = vmatprep.subr.bf16.mxu0 0
      %376 = vmatpush1.bf16.msra.mxu0 0
      %377 = vmatprep.subr.bf16.mxu0 0
      %378 = vmatpush1.bf16.msra.mxu0 0
      %379 = vmatprep.subr.bf16.mxu0 0
      %380 = vmatpush1.bf16.msra.mxu0 %v360
      %381 = vmatprep.subr.bf16.mxu0 0
      %382 = vmatpush1.bf16.msra.mxu0 %v359
      %383 = vmatprep.subr.bf16.mxu0 0
      %384 = vmatpush2.bf16.msra.mxu0 0
      %385 = vmatprep.subr.bf16.mxu0 0
      %386 = vmatpush2.bf16.msra.mxu0 0
      %387 = vmatprep.subr.bf16.mxu0 0
      %388 = vmatpush2.bf16.msra.mxu0 0
      %389 = vmatprep.subr.bf16.mxu0 0
      %390 = vmatpush2.bf16.msra.mxu0 0
      %391 = vmatprep.subr.bf16.mxu0 0
      %392 = vmatpush2.bf16.msra.mxu0 0
      %393 = vmatprep.subr.bf16.mxu0 0
      %394 = vmatpush2.bf16.msra.mxu0 0
      %395 = vmatprep.subr.bf16.mxu0 0
      %396 = vmatpush2.bf16.msra.mxu0 0
      %397 = vmatprep.subr.bf16.mxu0 0
      %398 = vmatpush2.bf16.msra.mxu0 0
      %399 = vmatprep.mubr.bf16.mxu0 0
      %400 = vmatmul.mubr.bf16.gmra.mxu0 %v365
      %v401 = vpop.f32.mrf.mxu0
      %v402 = vadd.f32 %v349, %v401
      %v403 = vpop.f32.mrf.mxu0
      %v404 = vpop.f32.mrf.mxu0
      %v405 = vadd.f32 %v349, %v404
      %v406 = vpop.f32.mrf.mxu0
      %407 = vdwg.mxu0
      %v408 = vmax.f32 %v402, 0.0
      %v409 = vmax.f32 %v405, 0.0
      %v410 = vpack.c.bf16 %v409, %v408
      %v411 = vld [vmem:[%s3] sm:$0xf]
      %v412 = vld [vmem:[%s3 + $0x4] sm:$0xf]
      %v413 = vld [vmem:[%s3 + $0x8] sm:$0xf]
      %v414 = vld [vmem:[%s3 + $0xc] sm:$0xf]
      %v415 = vld [vmem:[%s3 + $0x10] sm:$0xf]
      %v416 = vld [vmem:[%s3 + $0x14] sm:$0xf]
      %v417 = vld [vmem:[%s3 + $0x18] sm:$0xf]
      %v418 = vld [vmem:[%s3 + $0x1c] sm:$0xf]
      %v419 = vld [vmem:[%s4] sm:$0x1]
      %v421 = vlaneseq
      %v422 = vshrl.u32 %v421, 7
      %v423 = vsub.s32 0, %v422
      %v424 = vrot.slane %v419, %v423
      %v434 = vunpack.c.l.b16 %v411
      %v435 = vunpack.c.l.b16 %v412
      %v436 = vunpack.c.l.b16 %v413
      %v437 = vunpack.c.l.b16 %v414
      %v438 = vunpack.c.l.b16 %v415
      %v439 = vunpack.c.l.b16 %v416
      %v440 = vunpack.c.l.b16 %v417
      %v441 = vunpack.c.l.b16 %v418
      %v442 = vpack.c.b16 %v435, %v434
      %v443 = vpack.c.b16 %v437, %v436
      %v444 = vpack.c.b16 %v439, %v438
      %v445 = vpack.c.b16 %v441, %v440
      %vm450 = vcmask 523264
      %v452 = vsel %vm450, %v410, 0
      %454 = vmatprep.subr.bf16.mxu0 0
      %455 = vmatpush1.bf16.msra.mxu0 0
      %456 = vmatprep.subr.bf16.mxu0 0
      %457 = vmatpush1.bf16.msra.mxu0 0
      %458 = vmatprep.subr.bf16.mxu0 0
      %459 = vmatpush1.bf16.msra.mxu0 0
      %460 = vmatprep.subr.bf16.mxu0 0
      %461 = vmatpush1.bf16.msra.mxu0 0
      %462 = vmatprep.subr.bf16.mxu0 0
      %463 = vmatpush1.bf16.msra.mxu0 %v445
      %464 = vmatprep.subr.bf16.mxu0 0
      %465 = vmatpush1.bf16.msra.mxu0 %v444
      %466 = vmatprep.subr.bf16.mxu0 0
      %467 = vmatpush1.bf16.msra.mxu0 %v443
      %468 = vmatprep.subr.bf16.mxu0 0
      %469 = vmatpush1.bf16.msra.mxu0 %v442
      %470 = vmatprep.subr.bf16.mxu0 0
      %471 = vmatpush2.bf16.msra.mxu0 0
      %472 = vmatprep.subr.bf16.mxu0 0
      %473 = vmatpush2.bf16.msra.mxu0 0
      %474 = vmatprep.subr.bf16.mxu0 0
      %475 = vmatpush2.bf16.msra.mxu0 0
      %476 = vmatprep.subr.bf16.mxu0 0
      %477 = vmatpush2.bf16.msra.mxu0 0
      %478 = vmatprep.subr.bf16.mxu0 0
      %479 = vmatpush2.bf16.msra.mxu0 0
      %480 = vmatprep.subr.bf16.mxu0 0
      %481 = vmatpush2.bf16.msra.mxu0 0
      %482 = vmatprep.subr.bf16.mxu0 0
      %483 = vmatpush2.bf16.msra.mxu0 0
      %484 = vmatprep.subr.bf16.mxu0 0
      %485 = vmatpush2.bf16.msra.mxu0 0
      %486 = vmatprep.mubr.bf16.mxu0 0
      %487 = vmatmul.mubr.bf16.gmra.mxu0 %v452
      %v488 = vpop.f32.mrf.mxu0
      %v489 = vadd.f32 %v424, %v488
      %v490 = vpop.f32.mrf.mxu0
      %v491 = vpop.f32.mrf.mxu0
      %v492 = vadd.f32 %v424, %v491
      %v493 = vpop.f32.mrf.mxu0
      %494 = vdwg.mxu0
      %v495 = vmax.f32 %v489, 0.0
      %v496 = vmax.f32 %v492, 0.0
      %v497 = vpack.c.bf16 %v496, %v495
      %v498 = vld [vmem:[%s5] sm:$0xf]
      %v499 = vld [vmem:[%s5 + $0x4] sm:$0xf]
      %v500 = vld [vmem:[%s5 + $0x8] sm:$0xf]
      %v501 = vld [vmem:[%s5 + $0xc] sm:$0xf]
      %v502 = vld [vmem:[%s5 + $0x10] sm:$0xf]
      %v503 = vld [vmem:[%s5 + $0x14] sm:$0xf]
      %v504 = vld [vmem:[%s5 + $0x18] sm:$0xf]
      %v505 = vld [vmem:[%s5 + $0x1c] sm:$0xf]
      %v506 = vld [vmem:[%s6] sm:$0x1]
      %v508 = vlaneseq
      %v509 = vshrl.u32 %v508, 7
      %v510 = vsub.s32 0, %v509
      %v511 = vrot.slane %v506, %v510
      %v521 = vunpack.c.l.b16 %v498
      %v522 = vunpack.c.l.b16 %v499
      %v523 = vunpack.c.l.b16 %v500
      %v524 = vunpack.c.l.b16 %v501
      %v525 = vunpack.c.l.b16 %v502
      %v526 = vunpack.c.l.b16 %v503
      %v527 = vunpack.c.l.b16 %v504
      %v528 = vunpack.c.l.b16 %v505
      %v529 = vpack.c.b16 %v522, %v521
      %v530 = vpack.c.b16 %v524, %v523
      %v531 = vpack.c.b16 %v526, %v525
      %v532 = vpack.c.b16 %v528, %v527
      %v538 = vsel %vm450, %v497, 0
      %540 = vmatprep.subr.bf16.mxu0 0
      %541 = vmatpush1.bf16.msra.mxu0 0
      %542 = vmatprep.subr.bf16.mxu0 0
      %543 = vmatpush1.bf16.msra.mxu0 0
      %544 = vmatprep.subr.bf16.mxu0 0
      %545 = vmatpush1.bf16.msra.mxu0 0
      %546 = vmatprep.subr.bf16.mxu0 0
      %547 = vmatpush1.bf16.msra.mxu0 0
      %548 = vmatprep.subr.bf16.mxu0 0
      %549 = vmatpush1.bf16.msra.mxu0 %v532
      %550 = vmatprep.subr.bf16.mxu0 0
      %551 = vmatpush1.bf16.msra.mxu0 %v531
      %552 = vmatprep.subr.bf16.mxu0 0
      %553 = vmatpush1.bf16.msra.mxu0 %v530
      %554 = vmatprep.subr.bf16.mxu0 0
      %555 = vmatpush1.bf16.msra.mxu0 %v529
      %556 = vmatprep.subr.bf16.mxu0 0
      %557 = vmatpush2.bf16.msra.mxu0 0
      %558 = vmatprep.subr.bf16.mxu0 0
      %559 = vmatpush2.bf16.msra.mxu0 0
      %560 = vmatprep.subr.bf16.mxu0 0
      %561 = vmatpush2.bf16.msra.mxu0 0
      %562 = vmatprep.subr.bf16.mxu0 0
      %563 = vmatpush2.bf16.msra.mxu0 0
      %564 = vmatprep.subr.bf16.mxu0 0
      %565 = vmatpush2.bf16.msra.mxu0 0
      %566 = vmatprep.subr.bf16.mxu0 0
      %567 = vmatpush2.bf16.msra.mxu0 0
      %568 = vmatprep.subr.bf16.mxu0 0
      %569 = vmatpush2.bf16.msra.mxu0 0
      %570 = vmatprep.subr.bf16.mxu0 0
      %571 = vmatpush2.bf16.msra.mxu0 0
      %572 = vmatprep.mubr.bf16.mxu0 0
      %573 = vmatmul.mubr.bf16.gmra.mxu0 %v538
      %v574 = vpop.f32.mrf.mxu0
      %v575 = vadd.f32 %v511, %v574
      %v576 = vpop.f32.mrf.mxu0
      %v577 = vpop.f32.mrf.mxu0
      %v578 = vadd.f32 %v511, %v577
      %v579 = vpop.f32.mrf.mxu0
      %580 = vdwg.mxu0
      %v581 = vmax.f32 %v575, 0.0
      %v582 = vmax.f32 %v578, 0.0
      %v583 = vpack.c.bf16 %v582, %v581
      %v584 = vld [vmem:[%s7] sm:$0xf]
      %v585 = vld [vmem:[%s7 + $0x4] sm:$0xf]
      %v586 = vld [vmem:[%s7 + $0x8] sm:$0xf]
      %v587 = vld [vmem:[%s7 + $0xc] sm:$0xf]
      %v588 = vld [vmem:[%s7 + $0x10] sm:$0xf]
      %v589 = vld [vmem:[%s7 + $0x14] sm:$0xf]
      %v590 = vld [vmem:[%s7 + $0x18] sm:$0xf]
      %v591 = vld [vmem:[%s7 + $0x1c] sm:$0xf]
      %v592 = vld [vmem:[%s8] sm:$0x1]
      %v594 = vlaneseq
      %v595 = vshrl.u32 %v594, 7
      %v596 = vsub.s32 0, %v595
      %v597 = vrot.slane %v592, %v596
      %v607 = vunpack.c.l.b16 %v584
      %v608 = vunpack.c.l.b16 %v585
      %v609 = vunpack.c.l.b16 %v586
      %v610 = vunpack.c.l.b16 %v587
      %v611 = vunpack.c.l.b16 %v588
      %v612 = vunpack.c.l.b16 %v589
      %v613 = vunpack.c.l.b16 %v590
      %v614 = vunpack.c.l.b16 %v591
      %v615 = vpack.c.b16 %v608, %v607
      %v616 = vpack.c.b16 %v610, %v609
      %v617 = vpack.c.b16 %v612, %v611
      %v618 = vpack.c.b16 %v614, %v613
      %v624 = vsel %vm450, %v583, 0
      %626 = vmatprep.subr.bf16.mxu0 0
      %627 = vmatpush1.bf16.msra.mxu0 0
      %628 = vmatprep.subr.bf16.mxu0 0
      %629 = vmatpush1.bf16.msra.mxu0 0
      %630 = vmatprep.subr.bf16.mxu0 0
      %631 = vmatpush1.bf16.msra.mxu0 0
      %632 = vmatprep.subr.bf16.mxu0 0
      %633 = vmatpush1.bf16.msra.mxu0 0
      %634 = vmatprep.subr.bf16.mxu0 0
      %635 = vmatpush1.bf16.msra.mxu0 %v618
      %636 = vmatprep.subr.bf16.mxu0 0
      %637 = vmatpush1.bf16.msra.mxu0 %v617
      %638 = vmatprep.subr.bf16.mxu0 0
      %639 = vmatpush1.bf16.msra.mxu0 %v616
      %640 = vmatprep.subr.bf16.mxu0 0
      %641 = vmatpush1.bf16.msra.mxu0 %v615
      %642 = vmatprep.subr.bf16.mxu0 0
      %643 = vmatpush2.bf16.msra.mxu0 0
      %644 = vmatprep.subr.bf16.mxu0 0
      %645 = vmatpush2.bf16.msra.mxu0 0
      %646 = vmatprep.subr.bf16.mxu0 0
      %647 = vmatpush2.bf16.msra.mxu0 0
      %648 = vmatprep.subr.bf16.mxu0 0
      %649 = vmatpush2.bf16.msra.mxu0 0
      %650 = vmatprep.subr.bf16.mxu0 0
      %651 = vmatpush2.bf16.msra.mxu0 0
      %652 = vmatprep.subr.bf16.mxu0 0
      %653 = vmatpush2.bf16.msra.mxu0 0
      %654 = vmatprep.subr.bf16.mxu0 0
      %655 = vmatpush2.bf16.msra.mxu0 0
      %656 = vmatprep.subr.bf16.mxu0 0
      %657 = vmatpush2.bf16.msra.mxu0 0
      %658 = vmatprep.mubr.bf16.mxu0 0
      %659 = vmatmul.mubr.bf16.gmra.mxu0 %v624
      %v660 = vpop.f32.mrf.mxu0
      %v661 = vadd.f32 %v597, %v660
      %v662 = vpop.f32.mrf.mxu0
      %v663 = vpop.f32.mrf.mxu0
      %v664 = vadd.f32 %v597, %v663
      %v665 = vpop.f32.mrf.mxu0
      %666 = vdwg.mxu0
      %667 = vmax.xlane.f32.xlu0 %v661
      %v668 = vpop.xlane.xlu0 %667
      %669 = vmax.xlane.f32.xlu0 %v664
      %v670 = vpop.xlane.xlu0 %669
      %v671 = vsub.f32 %v661, %v668
      %v672 = vsub.f32 %v664, %v670
      %v673 = vmul.f32 %v671, 1.442695
      %v674 = vpow.pop %v673
      %v675 = vmul.f32 %v672, 1.442695
      %v676 = vpow.pop %v675
      %677 = vadd.xlane.f32.xlu0 %v674
      %v678 = vpop.xlane.xlu0 %677
      %679 = vadd.xlane.f32.xlu0 %v676
      %v680 = vpop.xlane.xlu0 %679
      %v681 = vlog2.pop %v678
      %v682 = vmul.f32 %v681, 0.6931472
      %v683 = vlog2.pop %v680
      %v684 = vmul.f32 %v683, 0.6931472
      %v685 = vsub.f32 %v671, %v682
      %v686 = vsub.f32 %v672, %v684
      %687 = vst [vmem:[%s334] sm:$0xff] %v685
      %688 = vst [vmem:[%s334 + $0x8] sm:$0xff] %v686
      %s689 = smul.u32 2, %s20
      %p690 = scmp.lt.s32.totalorder %s689, 3
      %s691 = scalar_select %p690, %s689, 3
      %s692 = smul.addr %s691, 8
      %s693 = scalar_lea.vmem %s9, %s692
      // Predicated region
      $region57: #{lenet_forward.1} parent=55 // pred_check
        %p694 = pneg %p232
      $region58: #{lenet_forward.1} parent=55 // pred_check_branch
        %696 = sbr.rel (%p694) target = $region60
      $region59: #{lenet_forward.1} parent=55 // pred_region
        %s697 = smul.u32 2, %s20
      $region60: #{lenet_forward.1} parent=55 // pred_fallthru
        _
    $region56: #{lenet_forward.1} parent=5 // pred_fallthru
      _
    %p698 = scmp.le.s32.totalorder 2, %s15
    // Predicated region
    $region61: #{lenet_forward.1} parent=5 // pred_check
      %p699 = pneg %p698
    $region62: #{lenet_forward.1} parent=5 // pred_check_branch
      %701 = sbr.rel (%p699) target = $region64
    $region63: #{lenet_forward.1} parent=5 // pred_region
      %s702 = ssub.s32 %s15, 2
      // Predicated region
      $region65: #{lenet_forward.1} parent=63 // pred_check
        %p703 = pneg %p238
      $region66: #{lenet_forward.1} parent=63 // pred_check_branch
        %705 = sbr.rel (%p703) target = $region68
      $region67: #{lenet_forward.1} parent=63 // pred_region
        %s706 = smul.u32 2, %s21
        %p707 = scmp.lt.s32.totalorder %s706, 3
        %s708 = scalar_select %p707, %s706, 3
        %s709 = smul.addr %s708, 8
        %s710 = scalar_lea.vmem %s9, %s709
      $region68: #{lenet_forward.1} parent=63 // pred_fallthru
        _
    $region64: #{lenet_forward.1} parent=5 // pred_fallthru
      _
  $region6: #{lenet_forward.1} parent=0 // loop_footer
    %s19 = sadd.s32 1, %s15
  $region7: #{lenet_forward.1} parent=0 // loop_footer_branch
    %14 = sbr.rel target = $region3
  $region8: #{lenet_forward.1} parent=0 // loop_exit
    _

</llo_original>
